<compile_context>
chip_gen: v7x
topology: tpu7x:2x2x1
jax: 0.10.0
libtpu: 0.0.40
codegen_flags: <defaults>
</compile_context>

<pallas_src>
import jax
import jax.numpy as jnp
from jax.experimental import pallas as pl
from jax.experimental.pallas import tpu as pltpu


# ----------------------------- Pallas kernel ------------------------------ #
def _identity_kernel(x_ref, o_ref):
    # Pass-through of the current (tr, Cpad) VMEM row-stripe.
    o_ref[...] = x_ref[...]


def _round_up(x: int, m: int) -> int:
    return ((x + m - 1) // m) * m


def _sublane_multiple(dtype) -> int:
    # f32 -> 8 rows/vreg, bf16/f16 -> 16, int8/fp8 -> 32 (sub-32-bit packing).
    itemsize = jnp.dtype(dtype).itemsize
    return max(8, 32 // max(itemsize, 1))


def _tile_budget_bytes() -> int:
    """Per-tile VMEM budget, generation-aware when possible."""
    default_budget = 4 << 20  # 4 MiB/tile: 4 double-buffered bufs = 16 MiB,
    #                           fits v5e's 16 MiB scoped default and is far
    #                           under v7x's 64 MiB physical VMEM.
    try:
        vmem_cap = pltpu.get_tpu_info().vmem_capacity_bytes
        # Keep 4 buffers (in x2 + out x2) at <= vmem_cap / 4, i.e. tile <= cap/16,
        # and never exceed 8 MiB/tile (copy BW plateaus well before that).
        return int(max(512 << 10, min(vmem_cap // 16, 8 << 20)))
    except Exception:
        return default_budget


def _pallas_identity_2d(x2d: jax.Array) -> jax.Array:
    """Identity over a 2D slab using large lane-dense row-stripe tiles."""
    R, C = x2d.shape
    dtype = x2d.dtype
    itemsize = jnp.dtype(dtype).itemsize
    sub = _sublane_multiple(dtype)

    # Lane axis: pad to a multiple of 128 so stores are unmasked, lane-dense.
    Cpad = _round_up(C, 128)

    # Row-stripe height: largest multiple of the sublane packing factor whose
    # (tr, Cpad) tile fits the per-tile VMEM budget; never taller than the
    # (sublane-rounded) slab itself.
    budget = _tile_budget_bytes()
    row_bytes = Cpad * itemsize
    tr = max(sub, (budget // row_bytes) // sub * sub)
    tr = min(tr, _round_up(R, sub))

    # Pad rows so the grid divides evenly (padded rows are cheap, copied once).
    Rpad = _round_up(R, tr)

    needs_pad = (Rpad != R) or (Cpad != C)
    x_in = jnp.pad(x2d, ((0, Rpad - R), (0, Cpad - C))) if needs_pad else x2d

    grid = (Rpad // tr,)
    tile_bytes = tr * Cpad * itemsize
    # Cover 2 double-buffered inputs + 2 outputs plus headroom; stay safely
    # under v7x's 64 MiB physical VMEM.
    vmem_limit = int(min(4 * tile_bytes + (8 << 20), 48 << 20))

    y_pad = pl.pallas_call(
        _identity_kernel,
        out_shape=jax.ShapeDtypeStruct((Rpad, Cpad), dtype),
        grid_spec=pltpu.PrefetchScalarGridSpec(
            num_scalar_prefetch=0,
            grid=grid,
            in_specs=[pl.BlockSpec((tr, Cpad), lambda i: (i, 0))],
            out_specs=pl.BlockSpec((tr, Cpad), lambda i: (i, 0)),
        ),
        compiler_params=pltpu.CompilerParams(
            dimension_semantics=("parallel",),  # shards rows across v7x's 2 TCs
            vmem_limit_bytes=vmem_limit,
        ),
    )(x_in)

    return y_pad[:R, :C] if needs_pad else y_pad


# -------------------- synthetic "diffusion_model" stand-in ----------------- #
def synthetic_diffusion_model(x: jax.Array, t: jax.Array, **kwargs) -> jax.Array:
    """Stand-in for the wrapped diffusion model.

    Signature mirrors a UNet call (x: NCHW latent, t: timesteps, extra kwargs
    like context accepted and ignored).  Hot path is the Pallas identity kernel.
    """
    B, C, H, W = x.shape
    x2d = x.reshape(B * C, H * W)          # lane-dense 2D slab (glue reshape)
    y2d = _pallas_identity_2d(x2d)
    return y2d.reshape(B, C, H, W)


# ------------------------------ IdentityWrapper ---------------------------- #
class IdentityWrapper:
    """JAX/Pallas equivalent of sgm IdentityWrapper: forwards to the model."""

    def __init__(self, diffusion_model, compile_model: bool = False):
        # torch.compile  ->  jax.jit  (identity when compile_model=False)
        compile_fn = jax.jit if compile_model else (lambda f: f)
        self.diffusion_model = compile_fn(diffusion_model)

    def __call__(self, *args, **kwargs):
        return self.diffusion_model(*args, **kwargs)

    # PyTorch-style alias
    forward = __call__


# ----------------------------------- main ---------------------------------- #
if __name__ == "__main__":
    key = jax.random.PRNGKey(0)
    kx, kt = jax.random.split(key)

    # Small shapes consistent with a diffusion UNet latent input (NCHW).
    B, C, H, W = 2, 4, 16, 16
    x = jax.random.normal(kx, (B, C, H, W), dtype=jnp.float32)
    t = jax.random.uniform(kt, (B,), dtype=jnp.float32)

    wrapper = IdentityWrapper(synthetic_diffusion_model, compile_model=True)
    out = wrapper(x, t, context=None)
    out = jax.block_until_ready(out)

    assert out.shape == x.shape and out.dtype == x.dtype
    assert bool(jnp.allclose(out, x)), "IdentityWrapper must be a pass-through"
    print("KERNEL_OK")
</pallas_src>

<mosaic_0001>
module attributes {stable_mosaic.version = 11 : i64} {
  func.func @_identity_kernel(%arg0: i32, %arg1: memref<8x256xf32, #tpu.memory_space<vmem>>, %arg2: memref<8x256xf32, #tpu.memory_space<vmem>>) attributes {dimension_semantics = [#tpu.dimension_semantics<parallel>], iteration_bounds = array<i64: 1>, scalar_prefetch = 0 : i64, scratch_operands = 0 : i64, tpu.core_type = #tpu.core_type<tc>, window_params = [{transform_indices = @transform_0, window_bounds = array<i64: 8, 256>}, {transform_indices = @transform_1, window_bounds = array<i64: 8, 256>}]} {
    %c0 = arith.constant 0 : index
    %c0_0 = arith.constant 0 : index
    %0 = vector.load %arg1[%c0, %c0_0] : memref<8x256xf32, #tpu.memory_space<vmem>>, vector<8x256xf32>
    %c0_1 = arith.constant 0 : index
    %c0_2 = arith.constant 0 : index
    %1 = vector.load %arg2[%c0_1, %c0_2] : memref<8x256xf32, #tpu.memory_space<vmem>>, vector<8x256xf32>
    tpu.vector_store %arg2[%c0_1, %c0_2], %0 {strides = array<i32>} : memref<8x256xf32, #tpu.memory_space<vmem>>, vector<8x256xf32>,
    return
  }
  func.func @transform_0(%arg0: i32) -> (i32, i32) {
    %c0_i32 = arith.constant 0 : i32
    %c0_i32_0 = arith.constant 0 : i32
    return %arg0, %c0_i32 : i32, i32
  }
  func.func @transform_1(%arg0: i32) -> (i32, i32) {
    %c0_i32 = arith.constant 0 : i32
    %c0_i32_0 = arith.constant 0 : i32
    return %arg0, %c0_i32 : i32, i32
  }
}

</mosaic_0001>

<llo_original>
// kernel: synthetic_diffusion_model.1
$region0: #{synthetic_diffusion_model.1}
  #allocation0 [shape = 'u32[]', space=smem, size = 0x4, offset = 0x4, fixed_abs, tag = 'smem constant byte address 0x4 - core index']
  #allocation1 [shape = 'u32[144,128]{1,0:T(1,128)}', space=vmem, size = 0x12000, scoped, tag = 'internal scratch']
  %s0 = inlined_call_operand.vmem [shape: f32[8,256], index: 0, kind: input, shape index: {}]
  %s1 = inlined_call_operand.vmem [shape: f32[8,256], index: 1, kind: output, shape index: {}]
  %s2 = sld [smem:[#allocation0]]
  $region14: #{synthetic_diffusion_model.1} parent=0
    _
  %s4 = ssub.s32 1, %s2
  %s5 = scalar_select 0, %s4, %s2
  // Predicated region
  $region2: #{synthetic_diffusion_model.1} parent=0 // pred_check
    _
  $region3: #{synthetic_diffusion_model.1} parent=0 // pred_check_branch
    %7 = sbr.rel (0) target = $region5
  $region4: #{synthetic_diffusion_model.1} parent=0 // pred_region
    _
  $region5: #{synthetic_diffusion_model.1} parent=0 // pred_fallthru
    _
  %v8 = vld [vmem:[%s0] sm:$0xff]
  %v9 = vld [vmem:[%s0 + $0x8] sm:$0xff]
  %10 = vst [vmem:[%s1] sm:$0xff] %v8
  %11 = vst [vmem:[%s1 + $0x8] sm:$0xff] %v9
  // Predicated region
  $region6: #{synthetic_diffusion_model.1} parent=0 // pred_check
    _
  $region7: #{synthetic_diffusion_model.1} parent=0 // pred_check_branch
    %13 = sbr.rel (0) target = $region9
  $region8: #{synthetic_diffusion_model.1} parent=0 // pred_region
    _
  $region9: #{synthetic_diffusion_model.1} parent=0 // pred_fallthru
    _
  // Predicated region
  $region10: #{synthetic_diffusion_model.1} parent=0 // pred_check
    _
  $region11: #{synthetic_diffusion_model.1} parent=0 // pred_check_branch
    %15 = sbr.rel (0) target = $region13
  $region12: #{synthetic_diffusion_model.1} parent=0 // pred_region
    _
  $region13: #{synthetic_diffusion_model.1} parent=0 // pred_fallthru
    _

</llo_original>
